<compile_context>
chip_gen: v6e
topology: v6e:2x2x1
jax: 0.10.0
libtpu: 0.0.40
codegen_flags: <defaults>
</compile_context>

<pallas_src>
import functools

import jax
import jax.numpy as jnp
from jax.experimental import pallas as pl
from jax.experimental.pallas import tpu as pltpu

SUBLANE = 8


def _round_up(v, m):
    return ((v + m - 1) // m) * m


def _fused_mlp_kernel(x_ref, w1t_ref, b1_ref, w2t_ref, b2_ref, o_ref, *,
                      relu1, relu2):
    """relu(relu(x @ W1t + b1) @ W2t + b2) on one batch tile.

    Matmuls run on the MXU in bf16 with f32 accumulation; bias + ReLU run in
    f32 on the VPU; the (tn, d_hid) intermediate never leaves VMEM/vregs.
    """
    x = x_ref[...].astype(jnp.bfloat16)                      # cheap VPU cast
    h = jnp.dot(x, w1t_ref[...], preferred_element_type=jnp.float32)
    h = h + b1_ref[...]                                      # (1, d_hid) broadcast
    if relu1:
        h = jnp.maximum(h, 0.0)
    y = jnp.dot(h.astype(w2t_ref.dtype), w2t_ref[...],
                preferred_element_type=jnp.float32)
    y = y + b2_ref[...]
    if relu2:
        y = jnp.maximum(y, 0.0)
    o_ref[...] = y.astype(o_ref.dtype)


def make_fused_mlp_stage(w1, b1, w2, b2, *, relu1=True, relu2=True,
                         tn_max=1024):
    """Fuse [Linear, ReLU, Linear, ReLU] into a single pallas_call.

    w1: (d_hid, d_in), w2: (d_out, d_hid) in PyTorch (out, in) convention.
    Transposes / reshapes / bf16 casts are done once here.
    """
    d_hid, d_in = w1.shape
    d_out = w2.shape[0]

    w1t = jnp.asarray(w1.T, dtype=jnp.bfloat16)          # (d_in, d_hid)
    b1r = jnp.asarray(b1, dtype=jnp.float32).reshape(1, d_hid)
    w2t = jnp.asarray(w2.T, dtype=jnp.bfloat16)          # (d_hid, d_out)
    b2r = jnp.asarray(b2, dtype=jnp.float32).reshape(1, d_out)

    kernel = functools.partial(_fused_mlp_kernel, relu1=relu1, relu2=relu2)

    @jax.jit
    def forward(x):
        n = x.shape[0]
        # Batch tile: multiple of 8 sublanes, capped at tn_max; for mid/large
        # batches force >= 2 grid steps so v7x's second TensorCore is used.
        tn = min(tn_max, _round_up(n, SUBLANE))
        if n > 512:
            tn = min(tn, _round_up(pl.cdiv(n, 2), 256))
        grid = (pl.cdiv(n, tn),)

        flops = 2 * n * (d_in * d_hid + d_hid * d_out)
        bytes_accessed = (
            x.dtype.itemsize * n * d_in                    # x read
            + 2 * (d_in * d_hid + d_hid * d_out)           # bf16 weights
            + 4 * (d_hid + d_out)                          # f32 biases
            + x.dtype.itemsize * n * d_out)                # output write

        return pl.pallas_call(
            kernel,
            out_shape=jax.ShapeDtypeStruct((n, d_out), x.dtype),
            grid=grid,
            in_specs=[
                pl.BlockSpec((tn, d_in), lambda i: (i, 0)),       # activations
                pl.BlockSpec((d_in, d_hid), lambda i: (0, 0)),    # W1t resident
                pl.BlockSpec((1, d_hid), lambda i: (0, 0)),       # b1 resident
                pl.BlockSpec((d_hid, d_out), lambda i: (0, 0)),   # W2t resident
                pl.BlockSpec((1, d_out), lambda i: (0, 0)),       # b2 resident
            ],
            out_specs=pl.BlockSpec((tn, d_out), lambda i: (i, 0)),
            compiler_params=pltpu.CompilerParams(
                dimension_semantics=("parallel",)),
            cost_estimate=pl.CostEstimate(
                flops=flops, transcendentals=0,
                bytes_accessed=bytes_accessed),
        )(x, w1t, b1r, w2t, b2r)

    return forward


class ListToModule:
    """JAX analogue of list_to_module: applies the module list sequentially."""

    def __init__(self, module_list):
        self.module_list = module_list

    def __call__(self, x):
        for module in self.module_list:
            x = module(x)
        return x


if __name__ == "__main__":
    key = jax.random.PRNGKey(0)
    k_x, k_w1, k_b1, k_w2, k_b2 = jax.random.split(key, 5)

    batch, d_in, d_hid, d_out = 8, 32, 64, 32

    # Deterministic synthetic parameters (PyTorch Linear (out, in) convention).
    w1 = jax.random.normal(k_w1, (d_hid, d_in), jnp.float32) * 0.1
    b1 = jax.random.normal(k_b1, (d_hid,), jnp.float32) * 0.1
    w2 = jax.random.normal(k_w2, (d_out, d_hid), jnp.float32) * 0.1
    b2 = jax.random.normal(k_b2, (d_out,), jnp.float32) * 0.1

    # module_list = [Linear(32,64), ReLU(), Linear(64,32), ReLU()], fused into
    # a single Pallas kernel (one launch, intermediate stays on-chip).
    fused_stage = make_fused_mlp_stage(w1, b1, w2, b2, relu1=True, relu2=True)
    model = ListToModule([fused_stage])

    x = jax.random.normal(k_x, (batch, d_in), jnp.float32)

    out = model(x)
    out = jax.block_until_ready(out)

    # Pure-JAX f32 reference of the sequential forward.  Weights are stored in
    # bf16 inside the kernel (f32 accumulation), so use a looser tolerance.
    ref = jnp.maximum(x @ w1.T + b1, 0.0)
    ref = jnp.maximum(ref @ w2.T + b2, 0.0)
    assert out.shape == (batch, d_out)
    assert jnp.allclose(out, ref, atol=3e-2, rtol=3e-2), "mismatch vs reference"

    print("KERNEL_OK")
</pallas_src>

<mosaic_0001>
module attributes {stable_mosaic.version = 11 : i64} {
  func.func @_fused_mlp_kernel(%arg0: i32, %arg1: memref<8x32xf32, #tpu.memory_space<vmem>>, %arg2: memref<32x64xbf16, #tpu.memory_space<vmem>>, %arg3: memref<1x64xf32, #tpu.memory_space<vmem>>, %arg4: memref<64x32xbf16, #tpu.memory_space<vmem>>, %arg5: memref<1x32xf32, #tpu.memory_space<vmem>>, %arg6: memref<8x32xf32, #tpu.memory_space<vmem>>) attributes {dimension_semantics = [#tpu.dimension_semantics<parallel>], iteration_bounds = array<i64: 1>, scalar_prefetch = 0 : i64, scratch_operands = 0 : i64, tpu.core_type = #tpu.core_type<tc>, window_params = [{transform_indices = @transform_0, window_bounds = array<i64: 8, 32>}, {pipeline_mode = #tpu.pipeline_mode<synchronous>, transform_indices = @transform_1, window_bounds = array<i64: 32, 64>}, {pipeline_mode = #tpu.pipeline_mode<synchronous>, transform_indices = @transform_2, window_bounds = array<i64: 1, 64>}, {pipeline_mode = #tpu.pipeline_mode<synchronous>, transform_indices = @transform_3, window_bounds = array<i64: 64, 32>}, {pipeline_mode = #tpu.pipeline_mode<synchronous>, transform_indices = @transform_4, window_bounds = array<i64: 1, 32>}, {transform_indices = @transform_5, window_bounds = array<i64: 8, 32>}]} {
    %c0 = arith.constant 0 : index
    %c0_0 = arith.constant 0 : index
    %0 = vector.load %arg1[%c0, %c0_0] : memref<8x32xf32, #tpu.memory_space<vmem>>, vector<8x32xf32>
    %1 = arith.truncf %0 : vector<8x32xf32> to vector<8x32xbf16>
    %c0_1 = arith.constant 0 : index
    %c0_2 = arith.constant 0 : index
    %2 = vector.load %arg2[%c0_1, %c0_2] : memref<32x64xbf16, #tpu.memory_space<vmem>>, vector<32x64xbf16>
    %cst = arith.constant dense<0.000000e+00> : vector<8x64xf32>
    %3 = tpu.matmul %1, %2, %cst {dimension_numbers = #tpu.dot_dimension_numbers<[1], [0], [0], [1], [0, 0, 1, 1], [], []>} : vector<8x32xbf16>, vector<32x64xbf16>, vector<8x64xf32> -> vector<8x64xf32>
    %c0_3 = arith.constant 0 : index
    %c0_4 = arith.constant 0 : index
    %4 = vector.load %arg3[%c0_3, %c0_4] : memref<1x64xf32, #tpu.memory_space<vmem>>, vector<1x64xf32>
    %5 = vector.broadcast %4 : vector<1x64xf32> to vector<8x64xf32>
    %6 = arith.addf %3, %5 : vector<8x64xf32>
    %cst_5 = arith.constant 0.000000e+00 : f32
    %7 = vector.broadcast %cst_5 : f32 to vector<8x64xf32>
    %8 = arith.maximumf %6, %7 : vector<8x64xf32>
    %9 = arith.truncf %8 : vector<8x64xf32> to vector<8x64xbf16>
    %c0_6 = arith.constant 0 : index
    %c0_7 = arith.constant 0 : index
    %10 = vector.load %arg4[%c0_6, %c0_7] : memref<64x32xbf16, #tpu.memory_space<vmem>>, vector<64x32xbf16>
    %cst_8 = arith.constant dense<0.000000e+00> : vector<8x32xf32>
    %11 = tpu.matmul %9, %10, %cst_8 {dimension_numbers = #tpu.dot_dimension_numbers<[1], [0], [0], [1], [0, 0, 1, 1], [], []>} : vector<8x64xbf16>, vector<64x32xbf16>, vector<8x32xf32> -> vector<8x32xf32>
    %c0_9 = arith.constant 0 : index
    %c0_10 = arith.constant 0 : index
    %12 = vector.load %arg5[%c0_9, %c0_10] : memref<1x32xf32, #tpu.memory_space<vmem>>, vector<1x32xf32>
    %13 = vector.broadcast %12 : vector<1x32xf32> to vector<8x32xf32>
    %14 = arith.addf %11, %13 : vector<8x32xf32>
    %cst_11 = arith.constant 0.000000e+00 : f32
    %15 = vector.broadcast %cst_11 : f32 to vector<8x32xf32>
    %16 = arith.maximumf %14, %15 : vector<8x32xf32>
    %c0_12 = arith.constant 0 : index
    %c0_13 = arith.constant 0 : index
    %17 = vector.load %arg6[%c0_12, %c0_13] : memref<8x32xf32, #tpu.memory_space<vmem>>, vector<8x32xf32>
    tpu.vector_store %arg6[%c0_12, %c0_13], %16 {strides = array<i32>} : memref<8x32xf32, #tpu.memory_space<vmem>>, vector<8x32xf32>,
    return
  }
  func.func @transform_0(%arg0: i32) -> (i32, i32) {
    %c0_i32 = arith.constant 0 : i32
    %c0_i32_0 = arith.constant 0 : i32
    return %arg0, %c0_i32 : i32, i32
  }
  func.func @transform_1(%arg0: i32) -> (i32, i32) {
    %c0_i32 = arith.constant 0 : i32
    %c0_i32_0 = arith.constant 0 : i32
    %c0_i32_1 = arith.constant 0 : i32
    return %c0_i32, %c0_i32_0 : i32, i32
  }
  func.func @transform_2(%arg0: i32) -> (i32, i32) {
    %c0_i32 = arith.constant 0 : i32
    %c0_i32_0 = arith.constant 0 : i32
    %c0_i32_1 = arith.constant 0 : i32
    return %c0_i32, %c0_i32_0 : i32, i32
  }
  func.func @transform_3(%arg0: i32) -> (i32, i32) {
    %c0_i32 = arith.constant 0 : i32
    %c0_i32_0 = arith.constant 0 : i32
    %c0_i32_1 = arith.constant 0 : i32
    return %c0_i32, %c0_i32_0 : i32, i32
  }
  func.func @transform_4(%arg0: i32) -> (i32, i32) {
    %c0_i32 = arith.constant 0 : i32
    %c0_i32_0 = arith.constant 0 : i32
    %c0_i32_1 = arith.constant 0 : i32
    return %c0_i32, %c0_i32_0 : i32, i32
  }
  func.func @transform_5(%arg0: i32) -> (i32, i32) {
    %c0_i32 = arith.constant 0 : i32
    %c0_i32_0 = arith.constant 0 : i32
    return %arg0, %c0_i32 : i32, i32
  }
}

</mosaic_0001>

<llo_original>
// kernel: forward.1
$region0: #{forward.1}
  #allocation0 [shape = 'u32[]', space=smem, size = 0x4, offset = 0x4, fixed_abs, tag = 'smem constant byte address 0x4 - core index']
  #allocation1 [shape = 'u32[144,128]{1,0:T(1,128)}', space=vmem, size = 0x12000, scoped, tag = 'internal scratch']
  %s0 = inlined_call_operand.hbm [shape: f32[8,32], index: 0, kind: input, shape index: {}]
  %s1 = inlined_call_operand.hbm [shape: bf16[32,64], index: 1, kind: input, shape index: {}]
  %s2 = inlined_call_operand.vmem [shape: f32[1,64], index: 2, kind: input, shape index: {}]
  %s3 = inlined_call_operand.hbm [shape: bf16[64,32], index: 3, kind: input, shape index: {}]
  %s4 = inlined_call_operand.vmem [shape: f32[1,32], index: 4, kind: input, shape index: {}]
  %s5 = inlined_call_operand.hbm [shape: f32[8,32], index: 5, kind: output, shape index: {}]
  %s6 = sld [smem:[#allocation0]]
  $region42: #{forward.1} parent=0
    _
  %s8 = ssub.s32 1, %s6
  %s9 = scalar_select 0, %s8, %s6
  $region1: #{forward.1} parent=0
    #allocation2 [shape = 'u8[4096]{0}', space=vmem, size = 0x1000, scoped, tag = 'input window, operand 0, single buffered']
    #allocation3 [shape = 's32[1]{0}', space=sflag, size = 0x4, scoped, tag = 'scoped memory for forward.1']
    #allocation4 [shape = 's32[1]{0}', space=sflag, size = 0x4, scoped, tag = 'scoped memory for forward.1']
    #allocation5 [shape = 'u8[8192]{0}', space=vmem, size = 0x2000, scoped, tag = 'input window, operand 1, single buffered']
    #allocation6 [shape = 's32[1]{0}', space=sflag, size = 0x4, scoped, tag = 'scoped memory for forward.1']
    #allocation7 [shape = 'u8[16384]{0}', space=vmem, size = 0x4000, scoped, tag = 'input window, operand 3, single buffered']
    #allocation8 [shape = 'u8[4096]{0}', space=vmem, size = 0x1000, scoped, tag = 'output window, operand 0, single buffered']
    %10 = vsyncpa [#allocation3], 0
    %11 = vsyncpa [#allocation6], 0
    %12 = vsyncpa [#allocation4], 0
    // Predicated region
    $region2: #{forward.1} parent=1 // pred_check
      _
    $region3: #{forward.1} parent=1 // pred_check_branch
      %14 = sbr.rel (0) target = $region5
    $region4: #{forward.1} parent=1 // pred_region
      %s16 = ssub.s32 128, 128
      %17 = vsyncadd [#allocation3], %s16
      %s19 = sshll.u32 [#allocation2], 4
      %s20 = int_to_ptr.vmem [resolvable:$true] %s19
      %22 = dma.hbm_to_vmem [thread:$0]  %s0, 128, %s20, [#allocation3]
    $region5: #{forward.1} parent=1 // pred_fallthru
      _
    // Predicated region
    $region6: #{forward.1} parent=1 // pred_check
      _
    $region7: #{forward.1} parent=1 // pred_check_branch
      %24 = sbr.rel (0) target = $region9
    $region8: #{forward.1} parent=1 // pred_region
      %s26 = ssub.s32 256, 256
      %27 = vsyncadd [#allocation6], %s26
      %s28 = sshll.u32 [#allocation5], 4
      %s29 = int_to_ptr.vmem [resolvable:$true] %s28
      %34 = dma.hbm_to_vmem [thread:$0]  %s1, 256, %s29, [#allocation6], 64, 64, 4
    $region9: #{forward.1} parent=1 // pred_fallthru
      _
    // Predicated region
    $region10: #{forward.1} parent=1 // pred_check
      _
    $region11: #{forward.1} parent=1 // pred_check_branch
      %36 = sbr.rel (0) target = $region13
    $region12: #{forward.1} parent=1 // pred_region
      _
    $region13: #{forward.1} parent=1 // pred_fallthru
      _
    // Predicated region
    $region14: #{forward.1} parent=1 // pred_check
      _
    $region15: #{forward.1} parent=1 // pred_check_branch
      %38 = sbr.rel (0) target = $region17
    $region16: #{forward.1} parent=1 // pred_region
      %s40 = ssub.s32 512, 512
      %41 = vsyncadd [#allocation6], %s40
      %s42 = sshll.u32 [#allocation7], 4
      %s43 = int_to_ptr.vmem [resolvable:$true] %s42
      %48 = dma.hbm_to_vmem [thread:$0]  %s3, 512, %s43, [#allocation6], 64, 64, 4
    $region17: #{forward.1} parent=1 // pred_fallthru
      _
    // Predicated region
    $region18: #{forward.1} parent=1 // pred_check
      _
    $region19: #{forward.1} parent=1 // pred_check_branch
      %50 = sbr.rel (0) target = $region21
    $region20: #{forward.1} parent=1 // pred_region
      _
    $region21: #{forward.1} parent=1 // pred_fallthru
      _
    // Predicated region
    $region22: #{forward.1} parent=1 // pred_check
      _
    $region23: #{forward.1} parent=1 // pred_check_branch
      %52 = sbr.rel (0) target = $region25
    $region24: #{forward.1} parent=1 // pred_region
      %53 = dma.done [#allocation3], 128
    $region25: #{forward.1} parent=1 // pred_fallthru
      _
    // Predicated region
    $region26: #{forward.1} parent=1 // pred_check
      _
    $region27: #{forward.1} parent=1 // pred_check_branch
      %55 = sbr.rel (0) target = $region29
    $region28: #{forward.1} parent=1 // pred_region
      %56 = dma.done [#allocation6], 256
    $region29: #{forward.1} parent=1 // pred_fallthru
      _
    // Predicated region
    $region30: #{forward.1} parent=1 // pred_check
      _
    $region31: #{forward.1} parent=1 // pred_check_branch
      %58 = sbr.rel (0) target = $region33
    $region32: #{forward.1} parent=1 // pred_region
      %59 = dma.done [#allocation6], 512
    $region33: #{forward.1} parent=1 // pred_fallthru
      _
    %v61 = vld [vmem:[#allocation2] sm:$0xff]
    %v62 = vpack.c.bf16 %v61, %v61
    %v63 = vld [vmem:[#allocation5] sm:$0xf]
    %v64 = vld [vmem:[#allocation5 + $0x4] sm:$0xf]
    %v65 = vld [vmem:[#allocation5 + $0x8] sm:$0xf]
    %v66 = vld [vmem:[#allocation5 + $0xc] sm:$0xf]
    %v67 = vld [vmem:[%s2] sm:$0x1]
    %v69 = vlaneseq
    %v70 = vshrl.u32 %v69, 7
    %v71 = vsub.s32 0, %v70
    %v72 = vrot.slane %v67, %v71
    %v78 = vunpack.c.l.b16 %v63
    %v79 = vunpack.c.l.b16 %v64
    %v80 = vunpack.c.l.b16 %v65
    %v81 = vunpack.c.l.b16 %v66
    %v82 = vpack.c.b16 %v79, %v78
    %v83 = vpack.c.b16 %v81, %v80
    %vm86 = vcmask 261120
    %v88 = vsel %vm86, %v62, 0
    %90 = vmatprep.subr.bf16.mxu0 0
    %91 = vmatpush1.bf16.msra.mxu0 0
    %92 = vmatprep.subr.bf16.mxu0 0
    %93 = vmatpush1.bf16.msra.mxu0 0
    %94 = vmatprep.subr.bf16.mxu0 0
    %95 = vmatpush1.bf16.msra.mxu0 0
    %96 = vmatprep.subr.bf16.mxu0 0
    %97 = vmatpush1.bf16.msra.mxu0 0
    %98 = vmatprep.subr.bf16.mxu0 0
    %99 = vmatpush1.bf16.msra.mxu0 0
    %100 = vmatprep.subr.bf16.mxu0 0
    %101 = vmatpush1.bf16.msra.mxu0 0
    %102 = vmatprep.subr.bf16.mxu0 0
    %103 = vmatpush1.bf16.msra.mxu0 %v83
    %104 = vmatprep.subr.bf16.mxu0 0
    %105 = vmatpush1.bf16.msra.mxu0 %v82
    %106 = vmatprep.subr.bf16.mxu0 0
    %107 = vmatpush2.bf16.msra.mxu0 0
    %108 = vmatprep.subr.bf16.mxu0 0
    %109 = vmatpush2.bf16.msra.mxu0 0
    %110 = vmatprep.subr.bf16.mxu0 0
    %111 = vmatpush2.bf16.msra.mxu0 0
    %112 = vmatprep.subr.bf16.mxu0 0
    %113 = vmatpush2.bf16.msra.mxu0 0
    %114 = vmatprep.subr.bf16.mxu0 0
    %115 = vmatpush2.bf16.msra.mxu0 0
    %116 = vmatprep.subr.bf16.mxu0 0
    %117 = vmatpush2.bf16.msra.mxu0 0
    %118 = vmatprep.subr.bf16.mxu0 0
    %119 = vmatpush2.bf16.msra.mxu0 0
    %120 = vmatprep.subr.bf16.mxu0 0
    %121 = vmatpush2.bf16.msra.mxu0 0
    %122 = vmatprep.mubr.bf16.mxu0 0
    %123 = vmatmul.mubr.bf16.gmra.mxu0 %v88
    %v124 = vpop.f32.mrf.mxu0
    %v125 = vadd.f32 %v72, %v124
    %v126 = vpop.f32.mrf.mxu0
    %v127 = vpop.f32.mrf.mxu0
    %v128 = vpop.f32.mrf.mxu0
    %129 = vdwg.mxu0
    %v130 = vmax.f32 %v125, 0.0
    %v131 = vpack.c.bf16 %v130, %v130
    %v132 = vld [vmem:[#allocation7] sm:$0xf]
    %v133 = vld [vmem:[#allocation7 + $0x4] sm:$0xf]
    %v134 = vld [vmem:[#allocation7 + $0x8] sm:$0xf]
    %v135 = vld [vmem:[#allocation7 + $0xc] sm:$0xf]
    %v136 = vld [vmem:[#allocation7 + $0x10] sm:$0xf]
    %v137 = vld [vmem:[#allocation7 + $0x14] sm:$0xf]
    %v138 = vld [vmem:[#allocation7 + $0x18] sm:$0xf]
    %v139 = vld [vmem:[#allocation7 + $0x1c] sm:$0xf]
    %v140 = vld [vmem:[%s4] sm:$0x1]
    %v142 = vlaneseq
    %v143 = vshrl.u32 %v142, 7
    %v144 = vsub.s32 0, %v143
    %v145 = vrot.slane %v140, %v144
    %v155 = vunpack.c.l.b16 %v132
    %v156 = vunpack.c.l.b16 %v133
    %v157 = vunpack.c.l.b16 %v134
    %v158 = vunpack.c.l.b16 %v135
    %v159 = vunpack.c.l.b16 %v136
    %v160 = vunpack.c.l.b16 %v137
    %v161 = vunpack.c.l.b16 %v138
    %v162 = vunpack.c.l.b16 %v139
    %v163 = vpack.c.b16 %v156, %v155
    %v164 = vpack.c.b16 %v158, %v157
    %v165 = vpack.c.b16 %v160, %v159
    %v166 = vpack.c.b16 %v162, %v161
    %vm171 = vcmask 523264
    %v173 = vsel %vm171, %v131, 0
    %175 = vmatprep.subr.bf16.mxu0 0
    %176 = vmatpush1.bf16.msra.mxu0 0
    %177 = vmatprep.subr.bf16.mxu0 0
    %178 = vmatpush1.bf16.msra.mxu0 0
    %179 = vmatprep.subr.bf16.mxu0 0
    %180 = vmatpush1.bf16.msra.mxu0 0
    %181 = vmatprep.subr.bf16.mxu0 0
    %182 = vmatpush1.bf16.msra.mxu0 0
    %183 = vmatprep.subr.bf16.mxu0 0
    %184 = vmatpush1.bf16.msra.mxu0 %v166
    %185 = vmatprep.subr.bf16.mxu0 0
    %186 = vmatpush1.bf16.msra.mxu0 %v165
    %187 = vmatprep.subr.bf16.mxu0 0
    %188 = vmatpush1.bf16.msra.mxu0 %v164
    %189 = vmatprep.subr.bf16.mxu0 0
    %190 = vmatpush1.bf16.msra.mxu0 %v163
    %191 = vmatprep.subr.bf16.mxu0 0
    %192 = vmatpush2.bf16.msra.mxu0 0
    %193 = vmatprep.subr.bf16.mxu0 0
    %194 = vmatpush2.bf16.msra.mxu0 0
    %195 = vmatprep.subr.bf16.mxu0 0
    %196 = vmatpush2.bf16.msra.mxu0 0
    %197 = vmatprep.subr.bf16.mxu0 0
    %198 = vmatpush2.bf16.msra.mxu0 0
    %199 = vmatprep.subr.bf16.mxu0 0
    %200 = vmatpush2.bf16.msra.mxu0 0
    %201 = vmatprep.subr.bf16.mxu0 0
    %202 = vmatpush2.bf16.msra.mxu0 0
    %203 = vmatprep.subr.bf16.mxu0 0
    %204 = vmatpush2.bf16.msra.mxu0 0
    %205 = vmatprep.subr.bf16.mxu0 0
    %206 = vmatpush2.bf16.msra.mxu0 0
    %207 = vmatprep.mubr.bf16.mxu0 0
    %208 = vmatmul.mubr.bf16.gmra.mxu0 %v173
    %v209 = vpop.f32.mrf.mxu0
    %v210 = vadd.f32 %v145, %v209
    %v211 = vpop.f32.mrf.mxu0
    %v212 = vpop.f32.mrf.mxu0
    %v213 = vpop.f32.mrf.mxu0
    %214 = vdwg.mxu0
    %v215 = vmax.f32 %v210, 0.0
    %216 = vst.msk [vmem:[#allocation8] sm:$0xff] %vm86, %v215
    // Predicated region
    $region34: #{forward.1} parent=1 // pred_check
      _
    $region35: #{forward.1} parent=1 // pred_check_branch
      %218 = sbr.rel (0) target = $region37
    $region36: #{forward.1} parent=1 // pred_region
      %s220 = ssub.s32 128, 128
      %221 = vsyncadd [#allocation4], %s220
      %s223 = sshll.u32 [#allocation8], 4
      %s224 = int_to_ptr.vmem [resolvable:$true] %s223
      %226 = dma.vmem_to_hbm [thread:$0]  %s224, 128, %s5, [#allocation4]
    $region37: #{forward.1} parent=1 // pred_fallthru
      _
    // Predicated region
    $region38: #{forward.1} parent=1 // pred_check
      _
    $region39: #{forward.1} parent=1 // pred_check_branch
      %228 = sbr.rel (0) target = $region41
    $region40: #{forward.1} parent=1 // pred_region
      %229 = dma.done [#allocation4], 128
    $region41: #{forward.1} parent=1 // pred_fallthru
      _
    %230 = vsyncpa [#allocation3], 1
    %231 = vsyncpa [#allocation6], 1
    %232 = vsyncpa [#allocation4], 1

</llo_original>
